<compile_context>
chip_gen: v7x
topology: tpu7x:2x2x1
jax: 0.10.0
libtpu: 0.0.40
codegen_flags: <defaults>
</compile_context>

<pallas_src>
import functools

import jax
import jax.numpy as jnp
from jax.experimental import pallas as pl
from jax.experimental.pallas import tpu as pltpu


def _residual_block_kernel(x_ref, w1_ref, b1_ref, w2_ref, b2_ref,
                           gamma_ref, beta_ref, out_ref, pad_ref,
                           *, Bb, T, C, K, P, dil, eps):
    M = Bb * T

    # Zero only the P causal-pad rows (tiny: (Bb, P, C) bf16).  Done every step
    # so correctness does not depend on how the batch axis is sharded across
    # TensorCores.
    pad_ref[:, :P, :] = jnp.zeros((Bb, P, C), pad_ref.dtype)

    # Stage the input block into the padded buffer, cast to bf16 for the MXU.
    pad_ref[:, P:, :] = x_ref[...].astype(pad_ref.dtype)

    # ---- conv1: dilated causal conv as K shifted (M, C) @ (C, C) matmuls ----
    acc1 = jnp.zeros((M, C), jnp.float32)
    for k in range(K):
        lhs = pad_ref[:, k * dil:k * dil + T, :].reshape(M, C)
        acc1 = acc1 + jnp.dot(lhs, w1_ref[k],
                              preferred_element_type=jnp.float32)
    h = jnp.maximum(acc1 + b1_ref[...], 0.0)
    # dropout: identity at inference.
    # TODO(synk): training-mode dropout (random mask) not implemented.

    # ---- conv2: reuse the same padded buffer (pad rows are still zero) ------
    pad_ref[:, P:, :] = h.reshape(Bb, T, C).astype(pad_ref.dtype)
    acc2 = jnp.zeros((M, C), jnp.float32)
    for k in range(K):
        lhs = pad_ref[:, k * dil:k * dil + T, :].reshape(M, C)
        acc2 = acc2 + jnp.dot(lhs, w2_ref[k],
                              preferred_element_type=jnp.float32)
    y = acc2 + b2_ref[...]

    # ---- LayerNorm over channels (fused single-pass statistics) -------------
    inv_c = 1.0 / C
    mean = jnp.sum(y, axis=-1, keepdims=True) * inv_c
    var = jnp.sum(y * y, axis=-1, keepdims=True) * inv_c - mean * mean
    ln = (y - mean) * jax.lax.rsqrt(var + eps) * gamma_ref[...] + beta_ref[...]

    # ---- residual add (f32 input, not the bf16 staging copy) + ReLU ---------
    res = x_ref[...].astype(jnp.float32).reshape(M, C)
    out = jnp.maximum(ln + res, 0.0)
    out_ref[...] = out.reshape(Bb, T, C).astype(out_ref.dtype)


def _pick_batch_block(batch, seq, target_m=256):
    """Largest divisor of `batch` such that block_b * seq approaches target_m."""
    want = max(1, -(-target_m // seq))          # ceil(target_m / seq)
    bb = min(batch, want)
    while batch % bb:
        bb -= 1
    return bb


def residual_block(x_nct, w1, b1, w2, b2, gamma, beta, *, kernel_size,
                   dilation, eps=1e-5):
    """Forward of the PyTorch ResidualBlock (inference mode).

    x_nct : (B, C, T) float32 (same layout as the PyTorch module).
    w1,w2 : (C, C, K) Conv1d weights;  b1,b2,gamma,beta : (C,).
    """
    B, C, T = x_nct.shape
    K = kernel_size
    P = (K - 1) * dilation

    Bb = _pick_batch_block(B, T)

    # channels-last inside the kernel (C on the lane axis)
    x_btc = jnp.transpose(x_nct, (0, 2, 1))                    # (B, T, C)

    # PyTorch Conv1d weight (C_out, C_in, K) -> (K, C_in, C_out); bf16 for MXU
    w1_k = jnp.transpose(w1, (2, 1, 0)).astype(jnp.bfloat16)
    w2_k = jnp.transpose(w2, (2, 1, 0)).astype(jnp.bfloat16)
    b1_2d = b1.reshape(1, C).astype(jnp.float32)
    b2_2d = b2.reshape(1, C).astype(jnp.float32)
    gamma_2d = gamma.reshape(1, C).astype(jnp.float32)
    beta_2d = beta.reshape(1, C).astype(jnp.float32)

    kernel = functools.partial(_residual_block_kernel, Bb=Bb, T=T, C=C, K=K,
                               P=P, dil=dilation, eps=eps)

    out_btc = pl.pallas_call(
        kernel,
        out_shape=jax.ShapeDtypeStruct((B, T, C), x_nct.dtype),
        grid_spec=pltpu.PrefetchScalarGridSpec(
            num_scalar_prefetch=0,
            grid=(B // Bb,),
            in_specs=[
                pl.BlockSpec((Bb, T, C), lambda b: (b, 0, 0)),   # x (conv in + residual)
                pl.BlockSpec((K, C, C), lambda b: (0, 0, 0)),    # w1 (resident)
                pl.BlockSpec((1, C), lambda b: (0, 0)),          # b1
                pl.BlockSpec((K, C, C), lambda b: (0, 0, 0)),    # w2 (resident)
                pl.BlockSpec((1, C), lambda b: (0, 0)),          # b2
                pl.BlockSpec((1, C), lambda b: (0, 0)),          # gamma
                pl.BlockSpec((1, C), lambda b: (0, 0)),          # beta
            ],
            out_specs=pl.BlockSpec((Bb, T, C), lambda b: (b, 0, 0)),
            # single bf16 padded-activation buffer, reused by both convs
            scratch_shapes=[pltpu.VMEM((Bb, T + P, C), jnp.bfloat16)],
        ),
        compiler_params=pltpu.CompilerParams(
            dimension_semantics=("parallel",)),
    )(x_btc, w1_k, b1_2d, w2_k, b2_2d, gamma_2d, beta_2d)

    return jnp.transpose(out_btc, (0, 2, 1))                   # back to (B, C, T)


def _reference(x_nct, w1, b1, w2, b2, gamma, beta, *, kernel_size, dilation,
               eps=1e-5):
    """Pure-JAX reference of the PyTorch forward (inference), using the same
    bf16-operand / f32-accumulation convolutions as the kernel."""
    P = (kernel_size - 1) * dilation

    def causal_conv(x, w, b):
        xp = jnp.pad(x, ((0, 0), (0, 0), (P, 0)))              # left pad only
        y = jax.lax.conv_general_dilated(
            xp.astype(jnp.bfloat16), w.astype(jnp.bfloat16),
            window_strides=(1,), padding="VALID", rhs_dilation=(dilation,),
            dimension_numbers=("NCH", "OIH", "NCH"),
            preferred_element_type=jnp.float32)
        return y + b[None, :, None]

    res = x_nct
    h = jax.nn.relu(causal_conv(x_nct, w1, b1))
    h = causal_conv(h, w2, b2)
    hp = jnp.transpose(h, (0, 2, 1))                            # (B, T, C)
    mean = jnp.mean(hp, axis=-1, keepdims=True)
    var = jnp.mean((hp - mean) ** 2, axis=-1, keepdims=True)
    hn = (hp - mean) / jnp.sqrt(var + eps) * gamma + beta
    hn = jnp.transpose(hn, (0, 2, 1))
    return jax.nn.relu(hn + res)


if __name__ == "__main__":
    B, C, T = 2, 128, 16
    kernel_size, dilation = 3, 2

    key = jax.random.PRNGKey(0)
    kx, k1, k2, k3, k4 = jax.random.split(key, 5)

    x = jax.random.normal(kx, (B, C, T), dtype=jnp.float32)

    # deterministic PyTorch-style Conv1d init: U(-s, s), s = 1/sqrt(C*K)
    s = 1.0 / (C * kernel_size) ** 0.5
    w1 = jax.random.uniform(k1, (C, C, kernel_size), jnp.float32, -s, s)
    b1 = jax.random.uniform(k2, (C,), jnp.float32, -s, s)
    w2 = jax.random.uniform(k3, (C, C, kernel_size), jnp.float32, -s, s)
    b2 = jax.random.uniform(k4, (C,), jnp.float32, -s, s)
    gamma = jnp.ones((C,), jnp.float32)                          # LayerNorm weight
    beta = jnp.zeros((C,), jnp.float32)                          # LayerNorm bias

    out = residual_block(x, w1, b1, w2, b2, gamma, beta,
                         kernel_size=kernel_size, dilation=dilation)
    out = jax.block_until_ready(out)

    ref = _reference(x, w1, b1, w2, b2, gamma, beta,
                     kernel_size=kernel_size, dilation=dilation)
    assert out.shape == (B, C, T)
    max_err = float(jnp.max(jnp.abs(out - ref)))
    assert jnp.allclose(out, ref, atol=2e-3, rtol=2e-3), \
        f"mismatch vs reference, max abs err {max_err}"

    print("KERNEL_OK")
</pallas_src>

<mosaic_0001>
module attributes {stable_mosaic.version = 11 : i64} {
  func.func @_residual_block_kernel(%arg0: i32, %arg1: memref<2x16x128xf32, #tpu.memory_space<vmem>>, %arg2: memref<3x128x128xbf16, #tpu.memory_space<vmem>>, %arg3: memref<1x128xf32, #tpu.memory_space<vmem>>, %arg4: memref<3x128x128xbf16, #tpu.memory_space<vmem>>, %arg5: memref<1x128xf32, #tpu.memory_space<vmem>>, %arg6: memref<1x128xf32, #tpu.memory_space<vmem>>, %arg7: memref<1x128xf32, #tpu.memory_space<vmem>>, %arg8: memref<2x16x128xf32, #tpu.memory_space<vmem>>, %arg9: memref<2x20x128xbf16, #tpu.memory_space<vmem>>) attributes {dimension_semantics = [#tpu.dimension_semantics<parallel>], iteration_bounds = array<i64: 1>, scalar_prefetch = 0 : i64, scratch_operands = 1 : i64, tpu.core_type = #tpu.core_type<tc>, window_params = [{transform_indices = @transform_0, window_bounds = array<i64: 2, 16, 128>}, {pipeline_mode = #tpu.pipeline_mode<synchronous>, transform_indices = @transform_1, window_bounds = array<i64: 3, 128, 128>}, {pipeline_mode = #tpu.pipeline_mode<synchronous>, transform_indices = @transform_2, window_bounds = array<i64: 1, 128>}, {pipeline_mode = #tpu.pipeline_mode<synchronous>, transform_indices = @transform_3, window_bounds = array<i64: 3, 128, 128>}, {pipeline_mode = #tpu.pipeline_mode<synchronous>, transform_indices = @transform_4, window_bounds = array<i64: 1, 128>}, {pipeline_mode = #tpu.pipeline_mode<synchronous>, transform_indices = @transform_5, window_bounds = array<i64: 1, 128>}, {pipeline_mode = #tpu.pipeline_mode<synchronous>, transform_indices = @transform_6, window_bounds = array<i64: 1, 128>}, {transform_indices = @transform_7, window_bounds = array<i64: 2, 16, 128>}]} {
    %cst = arith.constant 0.000000e+00 : bf16
    %0 = vector.broadcast %cst : bf16 to vector<2x4x128xbf16>
    %c0 = arith.constant 0 : index
    %c0_0 = arith.constant 0 : index
    %c0_1 = arith.constant 0 : index
    %1 = vector.load %arg9[%c0, %c0_0, %c0_1] : memref<2x20x128xbf16, #tpu.memory_space<vmem>>, vector<2x4x128xbf16>
    tpu.vector_store %arg9[%c0, %c0_0, %c0_1], %0 {strides = array<i32>} : memref<2x20x128xbf16, #tpu.memory_space<vmem>>, vector<2x4x128xbf16>,
    %c0_2 = arith.constant 0 : index
    %c0_3 = arith.constant 0 : index
    %c0_4 = arith.constant 0 : index
    %2 = vector.load %arg1[%c0_2, %c0_3, %c0_4] : memref<2x16x128xf32, #tpu.memory_space<vmem>>, vector<2x16x128xf32>
    %3 = arith.truncf %2 : vector<2x16x128xf32> to vector<2x16x128xbf16>
    %c0_5 = arith.constant 0 : index
    %c4 = arith.constant 4 : index
    %c0_6 = arith.constant 0 : index
    %4 = vector.load %arg9[%c0_5, %c4, %c0_6] : memref<2x20x128xbf16, #tpu.memory_space<vmem>>, vector<2x16x128xbf16>
    tpu.vector_store %arg9[%c0_5, %c4, %c0_6], %3 {strides = array<i32>} : memref<2x20x128xbf16, #tpu.memory_space<vmem>>, vector<2x16x128xbf16>,
    %cst_7 = arith.constant 0.000000e+00 : f32
    %5 = vector.broadcast %cst_7 : f32 to vector<32x128xf32>
    %c0_8 = arith.constant 0 : index
    %c0_9 = arith.constant 0 : index
    %c0_10 = arith.constant 0 : index
    %6 = vector.load %arg9[%c0_8, %c0_9, %c0_10] : memref<2x20x128xbf16, #tpu.memory_space<vmem>>, vector<2x16x128xbf16>
    %7 = vector.shape_cast %6 : vector<2x16x128xbf16> to vector<32x128xbf16>
    %c0_11 = arith.constant 0 : index
    %c0_12 = arith.constant 0 : index
    %c0_13 = arith.constant 0 : index
    %8 = vector.load %arg2[%c0_11, %c0_12, %c0_13] : memref<3x128x128xbf16, #tpu.memory_space<vmem>>, vector<1x128x128xbf16>
    %9 = vector.shape_cast %8 : vector<1x128x128xbf16> to vector<128x128xbf16>
    %cst_14 = arith.constant dense<0.000000e+00> : vector<32x128xf32>
    %10 = tpu.matmul %7, %9, %cst_14 {dimension_numbers = #tpu.dot_dimension_numbers<[1], [0], [0], [1], [0, 0, 1, 1], [], []>} : vector<32x128xbf16>, vector<128x128xbf16>, vector<32x128xf32> -> vector<32x128xf32>
    %11 = arith.addf %5, %10 : vector<32x128xf32>
    %c0_15 = arith.constant 0 : index
    %c2 = arith.constant 2 : index
    %c0_16 = arith.constant 0 : index
    %12 = vector.load %arg9[%c0_15, %c2, %c0_16] : memref<2x20x128xbf16, #tpu.memory_space<vmem>>, vector<2x16x128xbf16>
    %13 = vector.shape_cast %12 : vector<2x16x128xbf16> to vector<32x128xbf16>
    %c1 = arith.constant 1 : index
    %c0_17 = arith.constant 0 : index
    %c0_18 = arith.constant 0 : index
    %14 = vector.load %arg2[%c1, %c0_17, %c0_18] : memref<3x128x128xbf16, #tpu.memory_space<vmem>>, vector<1x128x128xbf16>
    %15 = vector.shape_cast %14 : vector<1x128x128xbf16> to vector<128x128xbf16>
    %cst_19 = arith.constant dense<0.000000e+00> : vector<32x128xf32>
    %16 = tpu.matmul %13, %15, %cst_19 {dimension_numbers = #tpu.dot_dimension_numbers<[1], [0], [0], [1], [0, 0, 1, 1], [], []>} : vector<32x128xbf16>, vector<128x128xbf16>, vector<32x128xf32> -> vector<32x128xf32>
    %17 = arith.addf %11, %16 : vector<32x128xf32>
    %c0_20 = arith.constant 0 : index
    %c4_21 = arith.constant 4 : index
    %c0_22 = arith.constant 0 : index
    %18 = vector.load %arg9[%c0_20, %c4_21, %c0_22] : memref<2x20x128xbf16, #tpu.memory_space<vmem>>, vector<2x16x128xbf16>
    %19 = vector.shape_cast %18 : vector<2x16x128xbf16> to vector<32x128xbf16>
    %c2_23 = arith.constant 2 : index
    %c0_24 = arith.constant 0 : index
    %c0_25 = arith.constant 0 : index
    %20 = vector.load %arg2[%c2_23, %c0_24, %c0_25] : memref<3x128x128xbf16, #tpu.memory_space<vmem>>, vector<1x128x128xbf16>
    %21 = vector.shape_cast %20 : vector<1x128x128xbf16> to vector<128x128xbf16>
    %cst_26 = arith.constant dense<0.000000e+00> : vector<32x128xf32>
    %22 = tpu.matmul %19, %21, %cst_26 {dimension_numbers = #tpu.dot_dimension_numbers<[1], [0], [0], [1], [0, 0, 1, 1], [], []>} : vector<32x128xbf16>, vector<128x128xbf16>, vector<32x128xf32> -> vector<32x128xf32>
    %23 = arith.addf %17, %22 : vector<32x128xf32>
    %c0_27 = arith.constant 0 : index
    %c0_28 = arith.constant 0 : index
    %24 = vector.load %arg3[%c0_27, %c0_28] : memref<1x128xf32, #tpu.memory_space<vmem>>, vector<1x128xf32>
    %25 = vector.broadcast %24 : vector<1x128xf32> to vector<32x128xf32>
    %26 = arith.addf %23, %25 : vector<32x128xf32>
    %cst_29 = arith.constant 0.000000e+00 : f32
    %27 = vector.broadcast %cst_29 : f32 to vector<32x128xf32>
    %28 = arith.maximumf %26, %27 : vector<32x128xf32>
    %29 = vector.shape_cast %28 : vector<32x128xf32> to vector<2x16x128xf32>
    %30 = arith.truncf %29 : vector<2x16x128xf32> to vector<2x16x128xbf16>
    %c0_30 = arith.constant 0 : index
    %c4_31 = arith.constant 4 : index
    %c0_32 = arith.constant 0 : index
    %31 = vector.load %arg9[%c0_30, %c4_31, %c0_32] : memref<2x20x128xbf16, #tpu.memory_space<vmem>>, vector<2x16x128xbf16>
    tpu.vector_store %arg9[%c0_30, %c4_31, %c0_32], %30 {strides = array<i32>} : memref<2x20x128xbf16, #tpu.memory_space<vmem>>, vector<2x16x128xbf16>,
    %cst_33 = arith.constant 0.000000e+00 : f32
    %32 = vector.broadcast %cst_33 : f32 to vector<32x128xf32>
    %c0_34 = arith.constant 0 : index
    %c0_35 = arith.constant 0 : index
    %c0_36 = arith.constant 0 : index
    %33 = vector.load %arg9[%c0_34, %c0_35, %c0_36] : memref<2x20x128xbf16, #tpu.memory_space<vmem>>, vector<2x16x128xbf16>
    %34 = vector.shape_cast %33 : vector<2x16x128xbf16> to vector<32x128xbf16>
    %c0_37 = arith.constant 0 : index
    %c0_38 = arith.constant 0 : index
    %c0_39 = arith.constant 0 : index
    %35 = vector.load %arg4[%c0_37, %c0_38, %c0_39] : memref<3x128x128xbf16, #tpu.memory_space<vmem>>, vector<1x128x128xbf16>
    %36 = vector.shape_cast %35 : vector<1x128x128xbf16> to vector<128x128xbf16>
    %cst_40 = arith.constant dense<0.000000e+00> : vector<32x128xf32>
    %37 = tpu.matmul %34, %36, %cst_40 {dimension_numbers = #tpu.dot_dimension_numbers<[1], [0], [0], [1], [0, 0, 1, 1], [], []>} : vector<32x128xbf16>, vector<128x128xbf16>, vector<32x128xf32> -> vector<32x128xf32>
    %38 = arith.addf %32, %37 : vector<32x128xf32>
    %c0_41 = arith.constant 0 : index
    %c2_42 = arith.constant 2 : index
    %c0_43 = arith.constant 0 : index
    %39 = vector.load %arg9[%c0_41, %c2_42, %c0_43] : memref<2x20x128xbf16, #tpu.memory_space<vmem>>, vector<2x16x128xbf16>
    %40 = vector.shape_cast %39 : vector<2x16x128xbf16> to vector<32x128xbf16>
    %c1_44 = arith.constant 1 : index
    %c0_45 = arith.constant 0 : index
    %c0_46 = arith.constant 0 : index
    %41 = vector.load %arg4[%c1_44, %c0_45, %c0_46] : memref<3x128x128xbf16, #tpu.memory_space<vmem>>, vector<1x128x128xbf16>
    %42 = vector.shape_cast %41 : vector<1x128x128xbf16> to vector<128x128xbf16>
    %cst_47 = arith.constant dense<0.000000e+00> : vector<32x128xf32>
    %43 = tpu.matmul %40, %42, %cst_47 {dimension_numbers = #tpu.dot_dimension_numbers<[1], [0], [0], [1], [0, 0, 1, 1], [], []>} : vector<32x128xbf16>, vector<128x128xbf16>, vector<32x128xf32> -> vector<32x128xf32>
    %44 = arith.addf %38, %43 : vector<32x128xf32>
    %c0_48 = arith.constant 0 : index
    %c4_49 = arith.constant 4 : index
    %c0_50 = arith.constant 0 : index
    %45 = vector.load %arg9[%c0_48, %c4_49, %c0_50] : memref<2x20x128xbf16, #tpu.memory_space<vmem>>, vector<2x16x128xbf16>
    %46 = vector.shape_cast %45 : vector<2x16x128xbf16> to vector<32x128xbf16>
    %c2_51 = arith.constant 2 : index
    %c0_52 = arith.constant 0 : index
    %c0_53 = arith.constant 0 : index
    %47 = vector.load %arg4[%c2_51, %c0_52, %c0_53] : memref<3x128x128xbf16, #tpu.memory_space<vmem>>, vector<1x128x128xbf16>
    %48 = vector.shape_cast %47 : vector<1x128x128xbf16> to vector<128x128xbf16>
    %cst_54 = arith.constant dense<0.000000e+00> : vector<32x128xf32>
    %49 = tpu.matmul %46, %48, %cst_54 {dimension_numbers = #tpu.dot_dimension_numbers<[1], [0], [0], [1], [0, 0, 1, 1], [], []>} : vector<32x128xbf16>, vector<128x128xbf16>, vector<32x128xf32> -> vector<32x128xf32>
    %50 = arith.addf %44, %49 : vector<32x128xf32>
    %c0_55 = arith.constant 0 : index
    %c0_56 = arith.constant 0 : index
    %51 = vector.load %arg5[%c0_55, %c0_56] : memref<1x128xf32, #tpu.memory_space<vmem>>, vector<1x128xf32>
    %52 = vector.broadcast %51 : vector<1x128xf32> to vector<32x128xf32>
    %53 = arith.addf %50, %52 : vector<32x128xf32>
    %cst_57 = arith.constant dense<0.000000e+00> : vector<32xf32>
    %54 = vector.multi_reduction <add>, %53, %cst_57 [1] : vector<32x128xf32> to vector<32xf32>
    %55 = vector.shape_cast %54 : vector<32xf32> to vector<32x1xf32>
    %cst_58 = arith.constant 7.812500e-03 : f32
    %56 = vector.broadcast %cst_58 : f32 to vector<32x1xf32>
    %57 = arith.mulf %55, %56 : vector<32x1xf32>
    %58 = arith.mulf %53, %53 : vector<32x128xf32>
    %cst_59 = arith.constant dense<0.000000e+00> : vector<32xf32>
    %59 = vector.multi_reduction <add>, %58, %cst_59 [1] : vector<32x128xf32> to vector<32xf32>
    %60 = vector.shape_cast %59 : vector<32xf32> to vector<32x1xf32>
    %cst_60 = arith.constant 7.812500e-03 : f32
    %61 = vector.broadcast %cst_60 : f32 to vector<32x1xf32>
    %62 = arith.mulf %60, %61 : vector<32x1xf32>
    %63 = arith.mulf %57, %57 : vector<32x1xf32>
    %64 = arith.subf %62, %63 : vector<32x1xf32>
    %65 = vector.broadcast %57 : vector<32x1xf32> to vector<32x128xf32>
    %66 = arith.subf %53, %65 : vector<32x128xf32>
    %cst_61 = arith.constant 9.99999974E-6 : f32
    %67 = vector.broadcast %cst_61 : f32 to vector<32x1xf32>
    %68 = arith.addf %64, %67 : vector<32x1xf32>
    %69 = math.rsqrt %68 : vector<32x1xf32>
    %70 = vector.broadcast %69 : vector<32x1xf32> to vector<32x128xf32>
    %71 = arith.mulf %66, %70 : vector<32x128xf32>
    %c0_62 = arith.constant 0 : index
    %c0_63 = arith.constant 0 : index
    %72 = vector.load %arg6[%c0_62, %c0_63] : memref<1x128xf32, #tpu.memory_space<vmem>>, vector<1x128xf32>
    %73 = vector.broadcast %72 : vector<1x128xf32> to vector<32x128xf32>
    %74 = arith.mulf %71, %73 : vector<32x128xf32>
    %c0_64 = arith.constant 0 : index
    %c0_65 = arith.constant 0 : index
    %75 = vector.load %arg7[%c0_64, %c0_65] : memref<1x128xf32, #tpu.memory_space<vmem>>, vector<1x128xf32>
    %76 = vector.broadcast %75 : vector<1x128xf32> to vector<32x128xf32>
    %77 = arith.addf %74, %76 : vector<32x128xf32>
    %c0_66 = arith.constant 0 : index
    %c0_67 = arith.constant 0 : index
    %c0_68 = arith.constant 0 : index
    %78 = vector.load %arg1[%c0_66, %c0_67, %c0_68] : memref<2x16x128xf32, #tpu.memory_space<vmem>>, vector<2x16x128xf32>
    %79 = vector.shape_cast %78 : vector<2x16x128xf32> to vector<32x128xf32>
    %80 = arith.addf %77, %79 : vector<32x128xf32>
    %cst_69 = arith.constant 0.000000e+00 : f32
    %81 = vector.broadcast %cst_69 : f32 to vector<32x128xf32>
    %82 = arith.maximumf %80, %81 : vector<32x128xf32>
    %83 = vector.shape_cast %82 : vector<32x128xf32> to vector<2x16x128xf32>
    %c0_70 = arith.constant 0 : index
    %c0_71 = arith.constant 0 : index
    %c0_72 = arith.constant 0 : index
    %84 = vector.load %arg8[%c0_70, %c0_71, %c0_72] : memref<2x16x128xf32, #tpu.memory_space<vmem>>, vector<2x16x128xf32>
    tpu.vector_store %arg8[%c0_70, %c0_71, %c0_72], %83 {strides = array<i32>} : memref<2x16x128xf32, #tpu.memory_space<vmem>>, vector<2x16x128xf32>,
    return
  }
  func.func @transform_0(%arg0: i32) -> (i32, i32, i32) {
    %c0_i32 = arith.constant 0 : i32
    %c0_i32_0 = arith.constant 0 : i32
    %c0_i32_1 = arith.constant 0 : i32
    return %arg0, %c0_i32, %c0_i32_0 : i32, i32, i32
  }
  func.func @transform_1(%arg0: i32) -> (i32, i32, i32) {
    %c0_i32 = arith.constant 0 : i32
    %c0_i32_0 = arith.constant 0 : i32
    %c0_i32_1 = arith.constant 0 : i32
    %c0_i32_2 = arith.constant 0 : i32
    return %c0_i32, %c0_i32_0, %c0_i32_1 : i32, i32, i32
  }
  func.func @transform_2(%arg0: i32) -> (i32, i32) {
    %c0_i32 = arith.constant 0 : i32
    %c0_i32_0 = arith.constant 0 : i32
    %c0_i32_1 = arith.constant 0 : i32
    return %c0_i32, %c0_i32_0 : i32, i32
  }
  func.func @transform_3(%arg0: i32) -> (i32, i32, i32) {
    %c0_i32 = arith.constant 0 : i32
    %c0_i32_0 = arith.constant 0 : i32
    %c0_i32_1 = arith.constant 0 : i32
    %c0_i32_2 = arith.constant 0 : i32
    return %c0_i32, %c0_i32_0, %c0_i32_1 : i32, i32, i32
  }
  func.func @transform_4(%arg0: i32) -> (i32, i32) {
    %c0_i32 = arith.constant 0 : i32
    %c0_i32_0 = arith.constant 0 : i32
    %c0_i32_1 = arith.constant 0 : i32
    return %c0_i32, %c0_i32_0 : i32, i32
  }
  func.func @transform_5(%arg0: i32) -> (i32, i32) {
    %c0_i32 = arith.constant 0 : i32
    %c0_i32_0 = arith.constant 0 : i32
    %c0_i32_1 = arith.constant 0 : i32
    return %c0_i32, %c0_i32_0 : i32, i32
  }
  func.func @transform_6(%arg0: i32) -> (i32, i32) {
    %c0_i32 = arith.constant 0 : i32
    %c0_i32_0 = arith.constant 0 : i32
    %c0_i32_1 = arith.constant 0 : i32
    return %c0_i32, %c0_i32_0 : i32, i32
  }
  func.func @transform_7(%arg0: i32) -> (i32, i32, i32) {
    %c0_i32 = arith.constant 0 : i32
    %c0_i32_0 = arith.constant 0 : i32
    %c0_i32_1 = arith.constant 0 : i32
    return %arg0, %c0_i32, %c0_i32_0 : i32, i32, i32
  }
}

</mosaic_0001>

<llo_original>
// kernel: tpu_custom_call.1
$region0: #{tpu_custom_call.1}
  #allocation0 [shape = 'u32[]', space=smem, size = 0x4, offset = 0x4, fixed_abs, tag = 'smem constant byte address 0x4 - core index']
  #allocation1 [shape = 'u32[144,128]{1,0:T(1,128)}', space=vmem, size = 0x12000, scoped, tag = 'internal scratch']
  #allocation2 [shape = 'bf16[2,20,128]{2,1,0:T(8,128)(2,1)}', space=vmem, size = 0x3000, scoped, tag = 'scratch operand']
  %s0 = inlined_call_operand.hbm [shape: f32[2,16,128], index: 0, kind: input, shape index: {}]
  %s1 = inlined_call_operand.hbm [shape: bf16[3,128,128], index: 1, kind: input, shape index: {}]
  %s2 = inlined_call_operand.vmem [shape: f32[1,128], index: 2, kind: input, shape index: {}]
  %s3 = inlined_call_operand.hbm [shape: bf16[3,128,128], index: 3, kind: input, shape index: {}]
  %s4 = inlined_call_operand.vmem [shape: f32[1,128], index: 4, kind: input, shape index: {}]
  %s5 = inlined_call_operand.vmem [shape: f32[1,128], index: 5, kind: input, shape index: {}]
  %s6 = inlined_call_operand.vmem [shape: f32[1,128], index: 6, kind: input, shape index: {}]
  %s7 = inlined_call_operand.hbm [shape: f32[2,16,128], index: 7, kind: output, shape index: {}]
  %s8 = sld [smem:[#allocation0]]
  $region50: #{tpu_custom_call.1} parent=0
    _
  %s10 = ssub.s32 1, %s8
  %s11 = scalar_select 0, %s10, %s8
  $region1: #{tpu_custom_call.1} parent=0
    #allocation3 [shape = 'u8[16384]{0}', space=vmem, size = 0x4000, scoped, tag = 'input window, operand 0, single buffered']
    #allocation4 [shape = 's32[1]{0}', space=sflag, size = 0x4, scoped, tag = 'scoped memory for tpu_custom_call.1']
    #allocation5 [shape = 's32[1]{0}', space=sflag, size = 0x4, scoped, tag = 'scoped memory for tpu_custom_call.1']
    #allocation6 [shape = 'u8[98304]{0}', space=vmem, size = 0x18000, scoped, tag = 'input window, operand 1, single buffered']
    #allocation7 [shape = 's32[1]{0}', space=sflag, size = 0x4, scoped, tag = 'scoped memory for tpu_custom_call.1']
    #allocation8 [shape = 'u8[98304]{0}', space=vmem, size = 0x18000, scoped, tag = 'input window, operand 3, single buffered']
    #allocation9 [shape = 'u8[16384]{0}', space=vmem, size = 0x4000, scoped, tag = 'output window, operand 0, single buffered']
    %12 = vsyncpa [#allocation4], 0
    %13 = vsyncpa [#allocation7], 0
    %14 = vsyncpa [#allocation5], 0
    // Predicated region
    $region2: #{tpu_custom_call.1} parent=1 // pred_check
      _
    $region3: #{tpu_custom_call.1} parent=1 // pred_check_branch
      %16 = sbr.rel (0) target = $region5
    $region4: #{tpu_custom_call.1} parent=1 // pred_region
      %s18 = ssub.s32 512, 512
      %19 = vsyncadd [#allocation4], %s18
      %s20 = sshll.u32 [#allocation3], 4
      %s21 = int_to_ptr.vmem [resolvable:$true] %s20
      %26 = dma.hbm_to_vmem [thread:$0]  %s0, 512, %s21, [#allocation4], 128, 128, 8
    $region5: #{tpu_custom_call.1} parent=1 // pred_fallthru
      _
    // Predicated region
    $region6: #{tpu_custom_call.1} parent=1 // pred_check
      _
    $region7: #{tpu_custom_call.1} parent=1 // pred_check_branch
      %28 = sbr.rel (0) target = $region9
    $region8: #{tpu_custom_call.1} parent=1 // pred_region
      %s30 = ssub.s32 3072, 3072
      %31 = vsyncadd [#allocation7], %s30
      %s32 = sshll.u32 [#allocation6], 4
      %s33 = int_to_ptr.vmem [resolvable:$true] %s32
      %38 = dma.hbm_to_vmem [thread:$0]  %s1, 3072, %s33, [#allocation7], 64, 64, 4
    $region9: #{tpu_custom_call.1} parent=1 // pred_fallthru
      _
    // Predicated region
    $region10: #{tpu_custom_call.1} parent=1 // pred_check
      _
    $region11: #{tpu_custom_call.1} parent=1 // pred_check_branch
      %40 = sbr.rel (0) target = $region13
    $region12: #{tpu_custom_call.1} parent=1 // pred_region
      _
    $region13: #{tpu_custom_call.1} parent=1 // pred_fallthru
      _
    // Predicated region
    $region14: #{tpu_custom_call.1} parent=1 // pred_check
      _
    $region15: #{tpu_custom_call.1} parent=1 // pred_check_branch
      %42 = sbr.rel (0) target = $region17
    $region16: #{tpu_custom_call.1} parent=1 // pred_region
      %s44 = ssub.s32 3072, 3072
      %45 = vsyncadd [#allocation7], %s44
      %s46 = sshll.u32 [#allocation8], 4
      %s47 = int_to_ptr.vmem [resolvable:$true] %s46
      %52 = dma.hbm_to_vmem [thread:$0]  %s3, 3072, %s47, [#allocation7], 64, 64, 4
    $region17: #{tpu_custom_call.1} parent=1 // pred_fallthru
      _
    // Predicated region
    $region18: #{tpu_custom_call.1} parent=1 // pred_check
      _
    $region19: #{tpu_custom_call.1} parent=1 // pred_check_branch
      %54 = sbr.rel (0) target = $region21
    $region20: #{tpu_custom_call.1} parent=1 // pred_region
      _
    $region21: #{tpu_custom_call.1} parent=1 // pred_fallthru
      _
    // Predicated region
    $region22: #{tpu_custom_call.1} parent=1 // pred_check
      _
    $region23: #{tpu_custom_call.1} parent=1 // pred_check_branch
      %56 = sbr.rel (0) target = $region25
    $region24: #{tpu_custom_call.1} parent=1 // pred_region
      _
    $region25: #{tpu_custom_call.1} parent=1 // pred_fallthru
      _
    // Predicated region
    $region26: #{tpu_custom_call.1} parent=1 // pred_check
      _
    $region27: #{tpu_custom_call.1} parent=1 // pred_check_branch
      %58 = sbr.rel (0) target = $region29
    $region28: #{tpu_custom_call.1} parent=1 // pred_region
      _
    $region29: #{tpu_custom_call.1} parent=1 // pred_fallthru
      _
    // Predicated region
    $region30: #{tpu_custom_call.1} parent=1 // pred_check
      _
    $region31: #{tpu_custom_call.1} parent=1 // pred_check_branch
      %60 = sbr.rel (0) target = $region33
    $region32: #{tpu_custom_call.1} parent=1 // pred_region
      %61 = dma.done [#allocation4], 512
    $region33: #{tpu_custom_call.1} parent=1 // pred_fallthru
      _
    // Predicated region
    $region34: #{tpu_custom_call.1} parent=1 // pred_check
      _
    $region35: #{tpu_custom_call.1} parent=1 // pred_check_branch
      %63 = sbr.rel (0) target = $region37
    $region36: #{tpu_custom_call.1} parent=1 // pred_region
      %64 = dma.done [#allocation7], 3072
    $region37: #{tpu_custom_call.1} parent=1 // pred_fallthru
      _
    // Predicated region
    $region38: #{tpu_custom_call.1} parent=1 // pred_check
      _
    $region39: #{tpu_custom_call.1} parent=1 // pred_check_branch
      %66 = sbr.rel (0) target = $region41
    $region40: #{tpu_custom_call.1} parent=1 // pred_region
      %67 = dma.done [#allocation7], 3072
    $region41: #{tpu_custom_call.1} parent=1 // pred_fallthru
      _
    %69 = vst [vmem:[#allocation2] sm:$0x3] 0
    %70 = vst [vmem:[#allocation2 + $0xc] sm:$0x3] 0
    %v71 = vld [vmem:[#allocation3] sm:$0xff]
    %v72 = vld [vmem:[#allocation3 + $0x8] sm:$0xff]
    %v73 = vld [vmem:[#allocation3 + $0x10] sm:$0xff]
    %v74 = vld [vmem:[#allocation3 + $0x18] sm:$0xff]
    %v75 = vpack.c.bf16 %v72, %v71
    %v76 = vpack.c.bf16 %v74, %v73
    %v79 = vunpack.c.l.b16 %v75
    %v80 = vunpack.c.h.b16 %v75
    %v81 = vunpack.c.l.b16 %v76
    %v82 = vunpack.c.h.b16 %v76
    %v83 = vpack.c.b16 %v79, %v79
    %v84 = vpack.c.b16 %v80, %v80
    %v85 = vpack.c.b16 %v81, %v81
    %v86 = vpack.c.b16 %v82, %v82
    %vm87 = vcmask 1041408
    %vm88 = vcmask 1045508
    %vm89 = vmor %vm87, %vm88
    %v90 = vrot.slane %v83, 6
    %v91 = vrot.slane %v90, 4
    %v92 = vrot.slane %v84, 6
    %v93 = vsel %vm89, %v91, %v92
    %v94 = vrot.slane %v92, 4
    %v95 = vrot.slane %v85, 6
    %v96 = vrot.slane %v95, 4
    %v97 = vrot.slane %v86, 6
    %v98 = vsel %vm89, %v96, %v97
    %v99 = vrot.slane %v97, 4
    %106 = vst [vmem:[#allocation2] sm:$0xc] %v90
    %107 = vst [vmem:[#allocation2 + $0x4] sm:$0xf] %v93
    %108 = vst [vmem:[#allocation2 + $0x8] sm:$0x3] %v94
    %109 = vst [vmem:[#allocation2 + $0xc] sm:$0xc] %v95
    %110 = vst [vmem:[#allocation2 + $0x10] sm:$0xf] %v98
    %111 = vst [vmem:[#allocation2 + $0x14] sm:$0x3] %v99
    %v112 = vld [vmem:[#allocation2] sm:$0xf]
    %v113 = vld [vmem:[#allocation2 + $0x4] sm:$0xf]
    %v114 = vld [vmem:[#allocation2 + $0xc] sm:$0xf]
    %v115 = vld [vmem:[#allocation2 + $0x10] sm:$0xf]
    %v116 = vld [vmem:[#allocation6] sm:$0xf]
    %v117 = vld [vmem:[#allocation6 + $0x4] sm:$0xf]
    %v118 = vld [vmem:[#allocation6 + $0x8] sm:$0xf]
    %v119 = vld [vmem:[#allocation6 + $0xc] sm:$0xf]
    %v120 = vld [vmem:[#allocation6 + $0x10] sm:$0xf]
    %v121 = vld [vmem:[#allocation6 + $0x14] sm:$0xf]
    %v122 = vld [vmem:[#allocation6 + $0x18] sm:$0xf]
    %v123 = vld [vmem:[#allocation6 + $0x1c] sm:$0xf]
    %v124 = vld [vmem:[#allocation6 + $0x20] sm:$0xf]
    %v125 = vld [vmem:[#allocation6 + $0x24] sm:$0xf]
    %v126 = vld [vmem:[#allocation6 + $0x28] sm:$0xf]
    %v127 = vld [vmem:[#allocation6 + $0x2c] sm:$0xf]
    %v128 = vld [vmem:[#allocation6 + $0x30] sm:$0xf]
    %v129 = vld [vmem:[#allocation6 + $0x34] sm:$0xf]
    %v130 = vld [vmem:[#allocation6 + $0x38] sm:$0xf]
    %v131 = vld [vmem:[#allocation6 + $0x3c] sm:$0xf]
    %v132 = vld [vmem:[#allocation2] sm:$0xe]
    %v133 = vld [vmem:[#allocation2 + $0x8] sm:$0x1]
    %v134 = vld [vmem:[#allocation2 + $0xc] sm:$0xe]
    %v135 = vld [vmem:[#allocation2 + $0x14] sm:$0x1]
    %vm142 = vcmask 1042432
    %vm143 = vcmask 1046532
    %vm144 = vmor %vm142, %vm143
    %v145 = vrot.slane %v132, 5
    %v146 = vrot.slane %v145, 4
    %v147 = vrot.slane %v113, 5
    %v148 = vsel %vm144, %v146, %v147
    %v149 = vrot.slane %v147, 4
    %v150 = vrot.slane %v133, 5
    %v151 = vsel %vm144, %v149, %v150
    %v152 = vrot.slane %v134, 5
    %v153 = vrot.slane %v152, 4
    %v154 = vrot.slane %v115, 5
    %v155 = vsel %vm144, %v153, %v154
    %v156 = vrot.slane %v154, 4
    %v157 = vrot.slane %v135, 5
    %v158 = vsel %vm144, %v156, %v157
    %s159 = scalar_lea.vmem [#allocation6], 64
    %v160 = vld [vmem:[%s159] sm:$0xf]
    %v161 = vld [vmem:[%s159 + $0x4] sm:$0xf]
    %v162 = vld [vmem:[%s159 + $0x8] sm:$0xf]
    %v163 = vld [vmem:[%s159 + $0xc] sm:$0xf]
    %v164 = vld [vmem:[%s159 + $0x10] sm:$0xf]
    %v165 = vld [vmem:[%s159 + $0x14] sm:$0xf]
    %v166 = vld [vmem:[%s159 + $0x18] sm:$0xf]
    %v167 = vld [vmem:[%s159 + $0x1c] sm:$0xf]
    %v168 = vld [vmem:[%s159 + $0x20] sm:$0xf]
    %v169 = vld [vmem:[%s159 + $0x24] sm:$0xf]
    %v170 = vld [vmem:[%s159 + $0x28] sm:$0xf]
    %v171 = vld [vmem:[%s159 + $0x2c] sm:$0xf]
    %v172 = vld [vmem:[%s159 + $0x30] sm:$0xf]
    %v173 = vld [vmem:[%s159 + $0x34] sm:$0xf]
    %v174 = vld [vmem:[%s159 + $0x38] sm:$0xf]
    %v175 = vld [vmem:[%s159 + $0x3c] sm:$0xf]
    %v176 = vunpack.c.l.b16 %v148
    %v177 = vunpack.c.l.b16 %v151
    %v178 = vunpack.c.l.b16 %v155
    %v179 = vunpack.c.l.b16 %v158
    %v180 = vpack.c.b16 %v177, %v176
    %v181 = vpack.c.b16 %v179, %v178
    %v200 = vunpack.c.l.b16 %v160
    %v201 = vunpack.c.l.b16 %v161
    %v202 = vunpack.c.l.b16 %v162
    %v203 = vunpack.c.l.b16 %v163
    %v204 = vunpack.c.l.b16 %v164
    %v205 = vunpack.c.l.b16 %v165
    %v206 = vunpack.c.l.b16 %v166
    %v207 = vunpack.c.l.b16 %v167
    %v208 = vunpack.c.l.b16 %v168
    %v209 = vunpack.c.l.b16 %v169
    %v210 = vunpack.c.l.b16 %v170
    %v211 = vunpack.c.l.b16 %v171
    %v212 = vunpack.c.l.b16 %v172
    %v213 = vunpack.c.l.b16 %v173
    %v214 = vunpack.c.l.b16 %v174
    %v215 = vunpack.c.l.b16 %v175
    %v216 = vpack.c.b16 %v201, %v200
    %v217 = vpack.c.b16 %v203, %v202
    %v218 = vpack.c.b16 %v205, %v204
    %v219 = vpack.c.b16 %v207, %v206
    %v220 = vpack.c.b16 %v209, %v208
    %v221 = vpack.c.b16 %v211, %v210
    %v222 = vpack.c.b16 %v213, %v212
    %v223 = vpack.c.b16 %v215, %v214
    %232 = vmatprep.subr.bf16.mxu0 0
    %233 = vmatpush1.bf16.msra.mxu0 %v216
    %234 = vmatprep.subr.bf16.mxu0 0
    %235 = vmatpush1.bf16.msra.mxu0 %v217
    %236 = vmatprep.subr.bf16.mxu0 0
    %237 = vmatpush1.bf16.msra.mxu0 %v218
    %238 = vmatprep.subr.bf16.mxu0 0
    %239 = vmatpush1.bf16.msra.mxu0 %v219
    %240 = vmatprep.subr.bf16.mxu0 0
    %241 = vmatpush1.bf16.msra.mxu0 %v220
    %242 = vmatprep.subr.bf16.mxu0 0
    %243 = vmatpush1.bf16.msra.mxu0 %v221
    %244 = vmatprep.subr.bf16.mxu0 0
    %245 = vmatpush1.bf16.msra.mxu0 %v222
    %246 = vmatprep.subr.bf16.mxu0 0
    %247 = vmatpush1.bf16.msra.mxu0 %v223
    %248 = vmatprep.subr.bf16.mxu0 0
    %249 = vmatpush1.bf16.msra.mxu0 0
    %250 = vmatprep.subr.bf16.mxu0 0
    %251 = vmatpush1.bf16.msra.mxu0 0
    %252 = vmatprep.subr.bf16.mxu0 0
    %253 = vmatpush1.bf16.msra.mxu0 0
    %254 = vmatprep.subr.bf16.mxu0 0
    %255 = vmatpush1.bf16.msra.mxu0 0
    %256 = vmatprep.subr.bf16.mxu0 0
    %257 = vmatpush1.bf16.msra.mxu0 0
    %258 = vmatprep.subr.bf16.mxu0 0
    %259 = vmatpush1.bf16.msra.mxu0 0
    %260 = vmatprep.subr.bf16.mxu0 0
    %261 = vmatpush1.bf16.msra.mxu0 0
    %262 = vmatprep.subr.bf16.mxu0 0
    %263 = vmatpush1.bf16.msra.mxu0 0
    %264 = vmatprep.mubr.bf16.mxu0 0
    %265 = vmatmul.mubr.bf16.gmra.mrb[0].mxu0 %v180
    %v266 = vpop.f32.mrb[0].mxu0
    %v267 = vadd.f32 0.0, %v266
    %v268 = vpop.f32.mrb[0].mxu0
    %v269 = vpop.f32.mrb[0].mxu0
    %v270 = vadd.f32 0.0, %v269
    %v271 = vpop.f32.mrb[0].mxu0
    %272 = vmatprep.mubr.bf16.mxu0 0
    %273 = vmatmul.mubr.bf16.gmra.mrb[0].mxu0 %v181
    %v274 = vpop.f32.mrb[0].mxu0
    %v275 = vadd.f32 0.0, %v274
    %v276 = vpop.f32.mrb[0].mxu0
    %v277 = vpop.f32.mrb[0].mxu0
    %v278 = vadd.f32 0.0, %v277
    %v279 = vpop.f32.mrb[0].mxu0
    %280 = vdwg.mxu0
    %v283 = vunpack.c.l.b16 %v112
    %v284 = vunpack.c.l.b16 %v113
    %v285 = vunpack.c.l.b16 %v114
    %v286 = vunpack.c.l.b16 %v115
    %v287 = vpack.c.b16 %v284, %v283
    %v288 = vpack.c.b16 %v286, %v285
    %v307 = vunpack.c.l.b16 %v116
    %v308 = vunpack.c.l.b16 %v117
    %v309 = vunpack.c.l.b16 %v118
    %v310 = vunpack.c.l.b16 %v119
    %v311 = vunpack.c.l.b16 %v120
    %v312 = vunpack.c.l.b16 %v121
    %v313 = vunpack.c.l.b16 %v122
    %v314 = vunpack.c.l.b16 %v123
    %v315 = vunpack.c.l.b16 %v124
    %v316 = vunpack.c.l.b16 %v125
    %v317 = vunpack.c.l.b16 %v126
    %v318 = vunpack.c.l.b16 %v127
    %v319 = vunpack.c.l.b16 %v128
    %v320 = vunpack.c.l.b16 %v129
    %v321 = vunpack.c.l.b16 %v130
    %v322 = vunpack.c.l.b16 %v131
    %v323 = vpack.c.b16 %v308, %v307
    %v324 = vpack.c.b16 %v310, %v309
    %v325 = vpack.c.b16 %v312, %v311
    %v326 = vpack.c.b16 %v314, %v313
    %v327 = vpack.c.b16 %v316, %v315
    %v328 = vpack.c.b16 %v318, %v317
    %v329 = vpack.c.b16 %v320, %v319
    %v330 = vpack.c.b16 %v322, %v321
    %339 = vmatprep.subr.bf16.mxu0 0
    %340 = vmatpush1.bf16.msra.mxu0 %v323
    %341 = vmatprep.subr.bf16.mxu0 0
    %342 = vmatpush1.bf16.msra.mxu0 %v324
    %343 = vmatprep.subr.bf16.mxu0 0
    %344 = vmatpush1.bf16.msra.mxu0 %v325
    %345 = vmatprep.subr.bf16.mxu0 0
    %346 = vmatpush1.bf16.msra.mxu0 %v326
    %347 = vmatprep.subr.bf16.mxu0 0
    %348 = vmatpush1.bf16.msra.mxu0 %v327
    %349 = vmatprep.subr.bf16.mxu0 0
    %350 = vmatpush1.bf16.msra.mxu0 %v328
    %351 = vmatprep.subr.bf16.mxu0 0
    %352 = vmatpush1.bf16.msra.mxu0 %v329
    %353 = vmatprep.subr.bf16.mxu0 0
    %354 = vmatpush1.bf16.msra.mxu0 %v330
    %355 = vmatprep.subr.bf16.mxu0 0
    %356 = vmatpush1.bf16.msra.mxu0 0
    %357 = vmatprep.subr.bf16.mxu0 0
    %358 = vmatpush1.bf16.msra.mxu0 0
    %359 = vmatprep.subr.bf16.mxu0 0
    %360 = vmatpush1.bf16.msra.mxu0 0
    %361 = vmatprep.subr.bf16.mxu0 0
    %362 = vmatpush1.bf16.msra.mxu0 0
    %363 = vmatprep.subr.bf16.mxu0 0
    %364 = vmatpush1.bf16.msra.mxu0 0
    %365 = vmatprep.subr.bf16.mxu0 0
    %366 = vmatpush1.bf16.msra.mxu0 0
    %367 = vmatprep.subr.bf16.mxu0 0
    %368 = vmatpush1.bf16.msra.mxu0 0
    %369 = vmatprep.subr.bf16.mxu0 0
    %370 = vmatpush1.bf16.msra.mxu0 0
    %371 = vmatprep.mubr.bf16.mxu0 0
    %372 = vmatmul.mubr.bf16.gmra.mrb[0].mxu0 %v287
    %v373 = vpop.f32.mrb[0].mxu0
    %v374 = vadd.f32 %v267, %v373
    %v375 = vpop.f32.mrb[0].mxu0
    %v376 = vpop.f32.mrb[0].mxu0
    %v377 = vadd.f32 %v270, %v376
    %v378 = vpop.f32.mrb[0].mxu0
    %379 = vmatprep.mubr.bf16.mxu0 0
    %380 = vmatmul.mubr.bf16.gmra.mrb[0].mxu0 %v288
    %v381 = vpop.f32.mrb[0].mxu0
    %v382 = vadd.f32 %v275, %v381
    %v383 = vpop.f32.mrb[0].mxu0
    %v384 = vpop.f32.mrb[0].mxu0
    %v385 = vadd.f32 %v278, %v384
    %v386 = vpop.f32.mrb[0].mxu0
    %387 = vdwg.mxu0
    %v388 = vld [vmem:[#allocation2] sm:$0xc]
    %v389 = vld [vmem:[#allocation2 + $0x8] sm:$0x3]
    %v390 = vld [vmem:[#allocation2 + $0xc] sm:$0xc]
    %v391 = vld [vmem:[#allocation2 + $0x14] sm:$0x3]
    %v396 = vrot.slane %v388, 6
    %v397 = vrot.slane %v396, 4
    %v398 = vrot.slane %v113, 6
    %v399 = vsel %vm89, %v397, %v398
    %v400 = vrot.slane %v398, 4
    %v401 = vrot.slane %v389, 6
    %v402 = vsel %vm89, %v400, %v401
    %v403 = vrot.slane %v390, 6
    %v404 = vrot.slane %v403, 4
    %v405 = vrot.slane %v115, 6
    %v406 = vsel %vm89, %v404, %v405
    %v407 = vrot.slane %v405, 4
    %v408 = vrot.slane %v391, 6
    %v409 = vsel %vm89, %v407, %v408
    %s410 = scalar_lea.vmem [#allocation6], 128
    %v411 = vld [vmem:[%s410] sm:$0xf]
    %v412 = vld [vmem:[%s410 + $0x4] sm:$0xf]
    %v413 = vld [vmem:[%s410 + $0x8] sm:$0xf]
    %v414 = vld [vmem:[%s410 + $0xc] sm:$0xf]
    %v415 = vld [vmem:[%s410 + $0x10] sm:$0xf]
    %v416 = vld [vmem:[%s410 + $0x14] sm:$0xf]
    %v417 = vld [vmem:[%s410 + $0x18] sm:$0xf]
    %v418 = vld [vmem:[%s410 + $0x1c] sm:$0xf]
    %v419 = vld [vmem:[%s410 + $0x20] sm:$0xf]
    %v420 = vld [vmem:[%s410 + $0x24] sm:$0xf]
    %v421 = vld [vmem:[%s410 + $0x28] sm:$0xf]
    %v422 = vld [vmem:[%s410 + $0x2c] sm:$0xf]
    %v423 = vld [vmem:[%s410 + $0x30] sm:$0xf]
    %v424 = vld [vmem:[%s410 + $0x34] sm:$0xf]
    %v425 = vld [vmem:[%s410 + $0x38] sm:$0xf]
    %v426 = vld [vmem:[%s410 + $0x3c] sm:$0xf]
    %v427 = vunpack.c.l.b16 %v399
    %v428 = vunpack.c.l.b16 %v402
    %v429 = vunpack.c.l.b16 %v406
    %v430 = vunpack.c.l.b16 %v409
    %v431 = vpack.c.b16 %v428, %v427
    %v432 = vpack.c.b16 %v430, %v429
    %v451 = vunpack.c.l.b16 %v411
    %v452 = vunpack.c.l.b16 %v412
    %v453 = vunpack.c.l.b16 %v413
    %v454 = vunpack.c.l.b16 %v414
    %v455 = vunpack.c.l.b16 %v415
    %v456 = vunpack.c.l.b16 %v416
    %v457 = vunpack.c.l.b16 %v417
    %v458 = vunpack.c.l.b16 %v418
    %v459 = vunpack.c.l.b16 %v419
    %v460 = vunpack.c.l.b16 %v420
    %v461 = vunpack.c.l.b16 %v421
    %v462 = vunpack.c.l.b16 %v422
    %v463 = vunpack.c.l.b16 %v423
    %v464 = vunpack.c.l.b16 %v424
    %v465 = vunpack.c.l.b16 %v425
    %v466 = vunpack.c.l.b16 %v426
    %v467 = vpack.c.b16 %v452, %v451
    %v468 = vpack.c.b16 %v454, %v453
    %v469 = vpack.c.b16 %v456, %v455
    %v470 = vpack.c.b16 %v458, %v457
    %v471 = vpack.c.b16 %v460, %v459
    %v472 = vpack.c.b16 %v462, %v461
    %v473 = vpack.c.b16 %v464, %v463
    %v474 = vpack.c.b16 %v466, %v465
    %483 = vmatprep.subr.bf16.mxu0 0
    %484 = vmatpush1.bf16.msra.mxu0 %v467
    %485 = vmatprep.subr.bf16.mxu0 0
    %486 = vmatpush1.bf16.msra.mxu0 %v468
    %487 = vmatprep.subr.bf16.mxu0 0
    %488 = vmatpush1.bf16.msra.mxu0 %v469
    %489 = vmatprep.subr.bf16.mxu0 0
    %490 = vmatpush1.bf16.msra.mxu0 %v470
    %491 = vmatprep.subr.bf16.mxu0 0
    %492 = vmatpush1.bf16.msra.mxu0 %v471
    %493 = vmatprep.subr.bf16.mxu0 0
    %494 = vmatpush1.bf16.msra.mxu0 %v472
    %495 = vmatprep.subr.bf16.mxu0 0
    %496 = vmatpush1.bf16.msra.mxu0 %v473
    %497 = vmatprep.subr.bf16.mxu0 0
    %498 = vmatpush1.bf16.msra.mxu0 %v474
    %499 = vmatprep.subr.bf16.mxu0 0
    %500 = vmatpush1.bf16.msra.mxu0 0
    %501 = vmatprep.subr.bf16.mxu0 0
    %502 = vmatpush1.bf16.msra.mxu0 0
    %503 = vmatprep.subr.bf16.mxu0 0
    %504 = vmatpush1.bf16.msra.mxu0 0
    %505 = vmatprep.subr.bf16.mxu0 0
    %506 = vmatpush1.bf16.msra.mxu0 0
    %507 = vmatprep.subr.bf16.mxu0 0
    %508 = vmatpush1.bf16.msra.mxu0 0
    %509 = vmatprep.subr.bf16.mxu0 0
    %510 = vmatpush1.bf16.msra.mxu0 0
    %511 = vmatprep.subr.bf16.mxu0 0
    %512 = vmatpush1.bf16.msra.mxu0 0
    %513 = vmatprep.subr.bf16.mxu0 0
    %514 = vmatpush1.bf16.msra.mxu0 0
    %515 = vmatprep.mubr.bf16.mxu0 0
    %516 = vmatmul.mubr.bf16.gmra.mrb[0].mxu0 %v431
    %v517 = vpop.f32.mrb[0].mxu0
    %v518 = vadd.f32 0.0, %v517
    %v519 = vpop.f32.mrb[0].mxu0
    %v520 = vpop.f32.mrb[0].mxu0
    %v521 = vadd.f32 0.0, %v520
    %v522 = vpop.f32.mrb[0].mxu0
    %523 = vmatprep.mubr.bf16.mxu0 0
    %524 = vmatmul.mubr.bf16.gmra.mrb[0].mxu0 %v432
    %v525 = vpop.f32.mrb[0].mxu0
    %v526 = vadd.f32 0.0, %v525
    %v527 = vpop.f32.mrb[0].mxu0
    %v528 = vpop.f32.mrb[0].mxu0
    %v529 = vadd.f32 0.0, %v528
    %v530 = vpop.f32.mrb[0].mxu0
    %531 = vdwg.mxu0
    %v532 = vadd.f32 %v374, %v518
    %v533 = vadd.f32 %v377, %v521
    %v534 = vadd.f32 %v382, %v526
    %v535 = vadd.f32 %v385, %v529
    %v536 = vld [vmem:[%s2] sm:$0x1]
    %v538 = vlaneseq
    %v539 = vshrl.u32 %v538, 7
    %v540 = vsub.s32 0, %v539
    %v541 = vrot.slane %v536, %v540
    %v543 = vadd.f32 %v532, %v541
    %v544 = vadd.f32 %v533, %v541
    %v545 = vadd.f32 %v534, %v541
    %v546 = vadd.f32 %v535, %v541
    %v547 = vmax.f32 %v543, 0.0
    %v548 = vmax.f32 %v544, 0.0
    %v549 = vmax.f32 %v545, 0.0
    %v550 = vmax.f32 %v546, 0.0
    %v551 = vpack.c.bf16 %v548, %v547
    %v552 = vpack.c.bf16 %v550, %v549
    %v555 = vunpack.c.l.b16 %v551
    %v556 = vunpack.c.h.b16 %v551
    %v557 = vunpack.c.l.b16 %v552
    %v558 = vunpack.c.h.b16 %v552
    %v559 = vpack.c.b16 %v555, %v555
    %v560 = vpack.c.b16 %v556, %v556
    %v561 = vpack.c.b16 %v557, %v557
    %v562 = vpack.c.b16 %v558, %v558
    %v563 = vrot.slane %v559, 6
    %v564 = vrot.slane %v563, 4
    %v565 = vrot.slane %v560, 6
    %v566 = vsel %vm89, %v564, %v565
    %v567 = vrot.slane %v565, 4
    %v568 = vrot.slane %v561, 6
    %v569 = vrot.slane %v568, 4
    %v570 = vrot.slane %v562, 6
    %v571 = vsel %vm89, %v569, %v570
    %v572 = vrot.slane %v570, 4
    %579 = vst [vmem:[#allocation2] sm:$0xc] %v563
    %580 = vst [vmem:[#allocation2 + $0x4] sm:$0xf] %v566
    %581 = vst [vmem:[#allocation2 + $0x8] sm:$0x3] %v567
    %582 = vst [vmem:[#allocation2 + $0xc] sm:$0xc] %v568
    %583 = vst [vmem:[#allocation2 + $0x10] sm:$0xf] %v571
    %584 = vst [vmem:[#allocation2 + $0x14] sm:$0x3] %v572
    %v585 = vld [vmem:[#allocation2] sm:$0xf]
    %v586 = vld [vmem:[#allocation2 + $0x4] sm:$0xf]
    %v587 = vld [vmem:[#allocation2 + $0xc] sm:$0xf]
    %v588 = vld [vmem:[#allocation2 + $0x10] sm:$0xf]
    %v589 = vld [vmem:[#allocation8] sm:$0xf]
    %v590 = vld [vmem:[#allocation8 + $0x4] sm:$0xf]
    %v591 = vld [vmem:[#allocation8 + $0x8] sm:$0xf]
    %v592 = vld [vmem:[#allocation8 + $0xc] sm:$0xf]
    %v593 = vld [vmem:[#allocation8 + $0x10] sm:$0xf]
    %v594 = vld [vmem:[#allocation8 + $0x14] sm:$0xf]
    %v595 = vld [vmem:[#allocation8 + $0x18] sm:$0xf]
    %v596 = vld [vmem:[#allocation8 + $0x1c] sm:$0xf]
    %v597 = vld [vmem:[#allocation8 + $0x20] sm:$0xf]
    %v598 = vld [vmem:[#allocation8 + $0x24] sm:$0xf]
    %v599 = vld [vmem:[#allocation8 + $0x28] sm:$0xf]
    %v600 = vld [vmem:[#allocation8 + $0x2c] sm:$0xf]
    %v601 = vld [vmem:[#allocation8 + $0x30] sm:$0xf]
    %v602 = vld [vmem:[#allocation8 + $0x34] sm:$0xf]
    %v603 = vld [vmem:[#allocation8 + $0x38] sm:$0xf]
    %v604 = vld [vmem:[#allocation8 + $0x3c] sm:$0xf]
    %v605 = vld [vmem:[#allocation2] sm:$0xe]
    %v606 = vld [vmem:[#allocation2 + $0x8] sm:$0x1]
    %v607 = vld [vmem:[#allocation2 + $0xc] sm:$0xe]
    %v608 = vld [vmem:[#allocation2 + $0x14] sm:$0x1]
    %v615 = vrot.slane %v605, 5
    %v616 = vrot.slane %v615, 4
    %v617 = vrot.slane %v586, 5
    %v618 = vsel %vm144, %v616, %v617
    %v619 = vrot.slane %v617, 4
    %v620 = vrot.slane %v606, 5
    %v621 = vsel %vm144, %v619, %v620
    %v622 = vrot.slane %v607, 5
    %v623 = vrot.slane %v622, 4
    %v624 = vrot.slane %v588, 5
    %v625 = vsel %vm144, %v623, %v624
    %v626 = vrot.slane %v624, 4
    %v627 = vrot.slane %v608, 5
    %v628 = vsel %vm144, %v626, %v627
    %s629 = scalar_lea.vmem [#allocation8], 64
    %v630 = vld [vmem:[%s629] sm:$0xf]
    %v631 = vld [vmem:[%s629 + $0x4] sm:$0xf]
    %v632 = vld [vmem:[%s629 + $0x8] sm:$0xf]
    %v633 = vld [vmem:[%s629 + $0xc] sm:$0xf]
    %v634 = vld [vmem:[%s629 + $0x10] sm:$0xf]
    %v635 = vld [vmem:[%s629 + $0x14] sm:$0xf]
    %v636 = vld [vmem:[%s629 + $0x18] sm:$0xf]
    %v637 = vld [vmem:[%s629 + $0x1c] sm:$0xf]
    %v638 = vld [vmem:[%s629 + $0x20] sm:$0xf]
    %v639 = vld [vmem:[%s629 + $0x24] sm:$0xf]
    %v640 = vld [vmem:[%s629 + $0x28] sm:$0xf]
    %v641 = vld [vmem:[%s629 + $0x2c] sm:$0xf]
    %v642 = vld [vmem:[%s629 + $0x30] sm:$0xf]
    %v643 = vld [vmem:[%s629 + $0x34] sm:$0xf]
    %v644 = vld [vmem:[%s629 + $0x38] sm:$0xf]
    %v645 = vld [vmem:[%s629 + $0x3c] sm:$0xf]
    %v646 = vunpack.c.l.b16 %v618
    %v647 = vunpack.c.l.b16 %v621
    %v648 = vunpack.c.l.b16 %v625
    %v649 = vunpack.c.l.b16 %v628
    %v650 = vpack.c.b16 %v647, %v646
    %v651 = vpack.c.b16 %v649, %v648
    %v670 = vunpack.c.l.b16 %v630
    %v671 = vunpack.c.l.b16 %v631
    %v672 = vunpack.c.l.b16 %v632
    %v673 = vunpack.c.l.b16 %v633
    %v674 = vunpack.c.l.b16 %v634
    %v675 = vunpack.c.l.b16 %v635
    %v676 = vunpack.c.l.b16 %v636
    %v677 = vunpack.c.l.b16 %v637
    %v678 = vunpack.c.l.b16 %v638
    %v679 = vunpack.c.l.b16 %v639
    %v680 = vunpack.c.l.b16 %v640
    %v681 = vunpack.c.l.b16 %v641
    %v682 = vunpack.c.l.b16 %v642
    %v683 = vunpack.c.l.b16 %v643
    %v684 = vunpack.c.l.b16 %v644
    %v685 = vunpack.c.l.b16 %v645
    %v686 = vpack.c.b16 %v671, %v670
    %v687 = vpack.c.b16 %v673, %v672
    %v688 = vpack.c.b16 %v675, %v674
    %v689 = vpack.c.b16 %v677, %v676
    %v690 = vpack.c.b16 %v679, %v678
    %v691 = vpack.c.b16 %v681, %v680
    %v692 = vpack.c.b16 %v683, %v682
    %v693 = vpack.c.b16 %v685, %v684
    %702 = vmatprep.subr.bf16.mxu0 0
    %703 = vmatpush1.bf16.msra.mxu0 %v686
    %704 = vmatprep.subr.bf16.mxu0 0
    %705 = vmatpush1.bf16.msra.mxu0 %v687
    %706 = vmatprep.subr.bf16.mxu0 0
    %707 = vmatpush1.bf16.msra.mxu0 %v688
    %708 = vmatprep.subr.bf16.mxu0 0
    %709 = vmatpush1.bf16.msra.mxu0 %v689
    %710 = vmatprep.subr.bf16.mxu0 0
    %711 = vmatpush1.bf16.msra.mxu0 %v690
    %712 = vmatprep.subr.bf16.mxu0 0
    %713 = vmatpush1.bf16.msra.mxu0 %v691
    %714 = vmatprep.subr.bf16.mxu0 0
    %715 = vmatpush1.bf16.msra.mxu0 %v692
    %716 = vmatprep.subr.bf16.mxu0 0
    %717 = vmatpush1.bf16.msra.mxu0 %v693
    %718 = vmatprep.subr.bf16.mxu0 0
    %719 = vmatpush1.bf16.msra.mxu0 0
    %720 = vmatprep.subr.bf16.mxu0 0
    %721 = vmatpush1.bf16.msra.mxu0 0
    %722 = vmatprep.subr.bf16.mxu0 0
    %723 = vmatpush1.bf16.msra.mxu0 0
    %724 = vmatprep.subr.bf16.mxu0 0
    %725 = vmatpush1.bf16.msra.mxu0 0
    %726 = vmatprep.subr.bf16.mxu0 0
    %727 = vmatpush1.bf16.msra.mxu0 0
    %728 = vmatprep.subr.bf16.mxu0 0
    %729 = vmatpush1.bf16.msra.mxu0 0
    %730 = vmatprep.subr.bf16.mxu0 0
    %731 = vmatpush1.bf16.msra.mxu0 0
    %732 = vmatprep.subr.bf16.mxu0 0
    %733 = vmatpush1.bf16.msra.mxu0 0
    %734 = vmatprep.mubr.bf16.mxu0 0
    %735 = vmatmul.mubr.bf16.gmra.mrb[0].mxu0 %v650
    %v736 = vpop.f32.mrb[0].mxu0
    %v737 = vadd.f32 0.0, %v736
    %v738 = vpop.f32.mrb[0].mxu0
    %v739 = vpop.f32.mrb[0].mxu0
    %v740 = vadd.f32 0.0, %v739
    %v741 = vpop.f32.mrb[0].mxu0
    %742 = vmatprep.mubr.bf16.mxu0 0
    %743 = vmatmul.mubr.bf16.gmra.mrb[0].mxu0 %v651
    %v744 = vpop.f32.mrb[0].mxu0
    %v745 = vadd.f32 0.0, %v744
    %v746 = vpop.f32.mrb[0].mxu0
    %v747 = vpop.f32.mrb[0].mxu0
    %v748 = vadd.f32 0.0, %v747
    %v749 = vpop.f32.mrb[0].mxu0
    %750 = vdwg.mxu0
    %v753 = vunpack.c.l.b16 %v585
    %v754 = vunpack.c.l.b16 %v586
    %v755 = vunpack.c.l.b16 %v587
    %v756 = vunpack.c.l.b16 %v588
    %v757 = vpack.c.b16 %v754, %v753
    %v758 = vpack.c.b16 %v756, %v755
    %v777 = vunpack.c.l.b16 %v589
    %v778 = vunpack.c.l.b16 %v590
    %v779 = vunpack.c.l.b16 %v591
    %v780 = vunpack.c.l.b16 %v592
    %v781 = vunpack.c.l.b16 %v593
    %v782 = vunpack.c.l.b16 %v594
    %v783 = vunpack.c.l.b16 %v595
    %v784 = vunpack.c.l.b16 %v596
    %v785 = vunpack.c.l.b16 %v597
    %v786 = vunpack.c.l.b16 %v598
    %v787 = vunpack.c.l.b16 %v599
    %v788 = vunpack.c.l.b16 %v600
    %v789 = vunpack.c.l.b16 %v601
    %v790 = vunpack.c.l.b16 %v602
    %v791 = vunpack.c.l.b16 %v603
    %v792 = vunpack.c.l.b16 %v604
    %v793 = vpack.c.b16 %v778, %v777
    %v794 = vpack.c.b16 %v780, %v779
    %v795 = vpack.c.b16 %v782, %v781
    %v796 = vpack.c.b16 %v784, %v783
    %v797 = vpack.c.b16 %v786, %v785
    %v798 = vpack.c.b16 %v788, %v787
    %v799 = vpack.c.b16 %v790, %v789
    %v800 = vpack.c.b16 %v792, %v791
    %809 = vmatprep.subr.bf16.mxu0 0
    %810 = vmatpush1.bf16.msra.mxu0 %v793
    %811 = vmatprep.subr.bf16.mxu0 0
    %812 = vmatpush1.bf16.msra.mxu0 %v794
    %813 = vmatprep.subr.bf16.mxu0 0
    %814 = vmatpush1.bf16.msra.mxu0 %v795
    %815 = vmatprep.subr.bf16.mxu0 0
    %816 = vmatpush1.bf16.msra.mxu0 %v796
    %817 = vmatprep.subr.bf16.mxu0 0
    %818 = vmatpush1.bf16.msra.mxu0 %v797
    %819 = vmatprep.subr.bf16.mxu0 0
    %820 = vmatpush1.bf16.msra.mxu0 %v798
    %821 = vmatprep.subr.bf16.mxu0 0
    %822 = vmatpush1.bf16.msra.mxu0 %v799
    %823 = vmatprep.subr.bf16.mxu0 0
    %824 = vmatpush1.bf16.msra.mxu0 %v800
    %825 = vmatprep.subr.bf16.mxu0 0
    %826 = vmatpush1.bf16.msra.mxu0 0
    %827 = vmatprep.subr.bf16.mxu0 0
    %828 = vmatpush1.bf16.msra.mxu0 0
    %829 = vmatprep.subr.bf16.mxu0 0
    %830 = vmatpush1.bf16.msra.mxu0 0
    %831 = vmatprep.subr.bf16.mxu0 0
    %832 = vmatpush1.bf16.msra.mxu0 0
    %833 = vmatprep.subr.bf16.mxu0 0
    %834 = vmatpush1.bf16.msra.mxu0 0
    %835 = vmatprep.subr.bf16.mxu0 0
    %836 = vmatpush1.bf16.msra.mxu0 0
    %837 = vmatprep.subr.bf16.mxu0 0
    %838 = vmatpush1.bf16.msra.mxu0 0
    %839 = vmatprep.subr.bf16.mxu0 0
    %840 = vmatpush1.bf16.msra.mxu0 0
    %841 = vmatprep.mubr.bf16.mxu0 0
    %842 = vmatmul.mubr.bf16.gmra.mrb[0].mxu0 %v757
    %v843 = vpop.f32.mrb[0].mxu0
    %v844 = vadd.f32 %v737, %v843
    %v845 = vpop.f32.mrb[0].mxu0
    %v846 = vpop.f32.mrb[0].mxu0
    %v847 = vadd.f32 %v740, %v846
    %v848 = vpop.f32.mrb[0].mxu0
    %849 = vmatprep.mubr.bf16.mxu0 0
    %850 = vmatmul.mubr.bf16.gmra.mrb[0].mxu0 %v758
    %v851 = vpop.f32.mrb[0].mxu0
    %v852 = vadd.f32 %v745, %v851
    %v853 = vpop.f32.mrb[0].mxu0
    %v854 = vpop.f32.mrb[0].mxu0
    %v855 = vadd.f32 %v748, %v854
    %v856 = vpop.f32.mrb[0].mxu0
    %857 = vdwg.mxu0
    %v858 = vld [vmem:[#allocation2] sm:$0xc]
    %v859 = vld [vmem:[#allocation2 + $0x8] sm:$0x3]
    %v860 = vld [vmem:[#allocation2 + $0xc] sm:$0xc]
    %v861 = vld [vmem:[#allocation2 + $0x14] sm:$0x3]
    %v866 = vrot.slane %v858, 6
    %v867 = vrot.slane %v866, 4
    %v868 = vrot.slane %v586, 6
    %v869 = vsel %vm89, %v867, %v868
    %v870 = vrot.slane %v868, 4
    %v871 = vrot.slane %v859, 6
    %v872 = vsel %vm89, %v870, %v871
    %v873 = vrot.slane %v860, 6
    %v874 = vrot.slane %v873, 4
    %v875 = vrot.slane %v588, 6
    %v876 = vsel %vm89, %v874, %v875
    %v877 = vrot.slane %v875, 4
    %v878 = vrot.slane %v861, 6
    %v879 = vsel %vm89, %v877, %v878
    %s880 = scalar_lea.vmem [#allocation8], 128
    %v881 = vld [vmem:[%s880] sm:$0xf]
    %v882 = vld [vmem:[%s880 + $0x4] sm:$0xf]
    %v883 = vld [vmem:[%s880 + $0x8] sm:$0xf]
    %v884 = vld [vmem:[%s880 + $0xc] sm:$0xf]
    %v885 = vld [vmem:[%s880 + $0x10] sm:$0xf]
    %v886 = vld [vmem:[%s880 + $0x14] sm:$0xf]
    %v887 = vld [vmem:[%s880 + $0x18] sm:$0xf]
    %v888 = vld [vmem:[%s880 + $0x1c] sm:$0xf]
    %v889 = vld [vmem:[%s880 + $0x20] sm:$0xf]
    %v890 = vld [vmem:[%s880 + $0x24] sm:$0xf]
    %v891 = vld [vmem:[%s880 + $0x28] sm:$0xf]
    %v892 = vld [vmem:[%s880 + $0x2c] sm:$0xf]
    %v893 = vld [vmem:[%s880 + $0x30] sm:$0xf]
    %v894 = vld [vmem:[%s880 + $0x34] sm:$0xf]
    %v895 = vld [vmem:[%s880 + $0x38] sm:$0xf]
    %v896 = vld [vmem:[%s880 + $0x3c] sm:$0xf]
    %v897 = vunpack.c.l.b16 %v869
    %v898 = vunpack.c.l.b16 %v872
    %v899 = vunpack.c.l.b16 %v876
    %v900 = vunpack.c.l.b16 %v879
    %v901 = vpack.c.b16 %v898, %v897
    %v902 = vpack.c.b16 %v900, %v899
    %v921 = vunpack.c.l.b16 %v881
    %v922 = vunpack.c.l.b16 %v882
    %v923 = vunpack.c.l.b16 %v883
    %v924 = vunpack.c.l.b16 %v884
    %v925 = vunpack.c.l.b16 %v885
    %v926 = vunpack.c.l.b16 %v886
    %v927 = vunpack.c.l.b16 %v887
    %v928 = vunpack.c.l.b16 %v888
    %v929 = vunpack.c.l.b16 %v889
    %v930 = vunpack.c.l.b16 %v890
    %v931 = vunpack.c.l.b16 %v891
    %v932 = vunpack.c.l.b16 %v892
    %v933 = vunpack.c.l.b16 %v893
    %v934 = vunpack.c.l.b16 %v894
    %v935 = vunpack.c.l.b16 %v895
    %v936 = vunpack.c.l.b16 %v896
    %v937 = vpack.c.b16 %v922, %v921
    %v938 = vpack.c.b16 %v924, %v923
    %v939 = vpack.c.b16 %v926, %v925
    %v940 = vpack.c.b16 %v928, %v927
    %v941 = vpack.c.b16 %v930, %v929
    %v942 = vpack.c.b16 %v932, %v931
    %v943 = vpack.c.b16 %v934, %v933
    %v944 = vpack.c.b16 %v936, %v935
    %953 = vmatprep.subr.bf16.mxu0 0
    %954 = vmatpush1.bf16.msra.mxu0 %v937
    %955 = vmatprep.subr.bf16.mxu0 0
    %956 = vmatpush1.bf16.msra.mxu0 %v938
    %957 = vmatprep.subr.bf16.mxu0 0
    %958 = vmatpush1.bf16.msra.mxu0 %v939
    %959 = vmatprep.subr.bf16.mxu0 0
    %960 = vmatpush1.bf16.msra.mxu0 %v940
    %961 = vmatprep.subr.bf16.mxu0 0
    %962 = vmatpush1.bf16.msra.mxu0 %v941
    %963 = vmatprep.subr.bf16.mxu0 0
    %964 = vmatpush1.bf16.msra.mxu0 %v942
    %965 = vmatprep.subr.bf16.mxu0 0
    %966 = vmatpush1.bf16.msra.mxu0 %v943
    %967 = vmatprep.subr.bf16.mxu0 0
    %968 = vmatpush1.bf16.msra.mxu0 %v944
    %969 = vmatprep.subr.bf16.mxu0 0
    %970 = vmatpush1.bf16.msra.mxu0 0
    %971 = vmatprep.subr.bf16.mxu0 0
    %972 = vmatpush1.bf16.msra.mxu0 0
    %973 = vmatprep.subr.bf16.mxu0 0
    %974 = vmatpush1.bf16.msra.mxu0 0
    %975 = vmatprep.subr.bf16.mxu0 0
    %976 = vmatpush1.bf16.msra.mxu0 0
    %977 = vmatprep.subr.bf16.mxu0 0
    %978 = vmatpush1.bf16.msra.mxu0 0
    %979 = vmatprep.subr.bf16.mxu0 0
    %980 = vmatpush1.bf16.msra.mxu0 0
    %981 = vmatprep.subr.bf16.mxu0 0
    %982 = vmatpush1.bf16.msra.mxu0 0
    %983 = vmatprep.subr.bf16.mxu0 0
    %984 = vmatpush1.bf16.msra.mxu0 0
    %985 = vmatprep.mubr.bf16.mxu0 0
    %986 = vmatmul.mubr.bf16.gmra.mrb[0].mxu0 %v901
    %v987 = vpop.f32.mrb[0].mxu0
    %v988 = vadd.f32 0.0, %v987
    %v989 = vpop.f32.mrb[0].mxu0
    %v990 = vpop.f32.mrb[0].mxu0
    %v991 = vadd.f32 0.0, %v990
    %v992 = vpop.f32.mrb[0].mxu0
    %993 = vmatprep.mubr.bf16.mxu0 0
    %994 = vmatmul.mubr.bf16.gmra.mrb[0].mxu0 %v902
    %v995 = vpop.f32.mrb[0].mxu0
    %v996 = vadd.f32 0.0, %v995
    %v997 = vpop.f32.mrb[0].mxu0
    %v998 = vpop.f32.mrb[0].mxu0
    %v999 = vadd.f32 0.0, %v998
    %v1000 = vpop.f32.mrb[0].mxu0
    %1001 = vdwg.mxu0
    %v1002 = vadd.f32 %v844, %v988
    %v1003 = vadd.f32 %v847, %v991
    %v1004 = vadd.f32 %v852, %v996
    %v1005 = vadd.f32 %v855, %v999
    %v1006 = vld [vmem:[%s4] sm:$0x1]
    %v1008 = vlaneseq
    %v1009 = vshrl.u32 %v1008, 7
    %v1010 = vsub.s32 0, %v1009
    %v1011 = vrot.slane %v1006, %v1010
    %v1013 = vadd.f32 %v1002, %v1011
    %v1014 = vadd.f32 %v1003, %v1011
    %v1015 = vadd.f32 %v1004, %v1011
    %v1016 = vadd.f32 %v1005, %v1011
    %1017 = vadd.xlane.f32.xlu0 %v1013
    %v1018 = vpop.xlane.xlu0 %1017
    %1019 = vadd.xlane.f32.xlu0 %v1014
    %v1020 = vpop.xlane.xlu0 %1019
    %1021 = vadd.xlane.f32.xlu0 %v1015
    %v1022 = vpop.xlane.xlu0 %1021
    %1023 = vadd.xlane.f32.xlu0 %v1016
    %v1024 = vpop.xlane.xlu0 %1023
    %v1025 = vmul.f32 %v1018, 0.0078125
    %v1026 = vmul.f32 %v1020, 0.0078125
    %v1027 = vmul.f32 %v1022, 0.0078125
    %v1028 = vmul.f32 %v1024, 0.0078125
    %v1029 = vmul.f32 %v1013, %v1013
    %v1030 = vmul.f32 %v1014, %v1014
    %v1031 = vmul.f32 %v1015, %v1015
    %v1032 = vmul.f32 %v1016, %v1016
    %1033 = vadd.xlane.f32.xlu0 %v1029
    %v1034 = vpop.xlane.xlu0 %1033
    %1035 = vadd.xlane.f32.xlu0 %v1030
    %v1036 = vpop.xlane.xlu0 %1035
    %1037 = vadd.xlane.f32.xlu0 %v1031
    %v1038 = vpop.xlane.xlu0 %1037
    %1039 = vadd.xlane.f32.xlu0 %v1032
    %v1040 = vpop.xlane.xlu0 %1039
    %v1041 = vmul.f32 %v1034, 0.0078125
    %v1042 = vmul.f32 %v1036, 0.0078125
    %v1043 = vmul.f32 %v1038, 0.0078125
    %v1044 = vmul.f32 %v1040, 0.0078125
    %v1045 = vmul.f32 %v1025, %v1025
    %v1046 = vmul.f32 %v1026, %v1026
    %v1047 = vmul.f32 %v1027, %v1027
    %v1048 = vmul.f32 %v1028, %v1028
    %v1049 = vsub.f32 %v1041, %v1045
    %v1050 = vsub.f32 %v1042, %v1046
    %v1051 = vsub.f32 %v1043, %v1047
    %v1052 = vsub.f32 %v1044, %v1048
    %v1053 = vsub.f32 %v1013, %v1025
    %v1054 = vsub.f32 %v1014, %v1026
    %v1055 = vsub.f32 %v1015, %v1027
    %v1056 = vsub.f32 %v1016, %v1028
    %v1057 = vadd.f32 %v1049, 1e-05
    %v1058 = vadd.f32 %v1050, 1e-05
    %v1059 = vadd.f32 %v1051, 1e-05
    %v1060 = vadd.f32 %v1052, 1e-05
    %v1061 = vrsqrt.pop %v1057
    %v1062 = vrsqrt.pop %v1058
    %v1063 = vrsqrt.pop %v1059
    %v1064 = vrsqrt.pop %v1060
    %v1065 = vmul.f32 %v1053, %v1061
    %v1066 = vmul.f32 %v1054, %v1062
    %v1067 = vmul.f32 %v1055, %v1063
    %v1068 = vmul.f32 %v1056, %v1064
    %v1069 = vld [vmem:[%s5] sm:$0x1]
    %v1071 = vlaneseq
    %v1072 = vshrl.u32 %v1071, 7
    %v1073 = vsub.s32 0, %v1072
    %v1074 = vrot.slane %v1069, %v1073
    %v1076 = vmul.f32 %v1065, %v1074
    %v1077 = vmul.f32 %v1066, %v1074
    %v1078 = vmul.f32 %v1067, %v1074
    %v1079 = vmul.f32 %v1068, %v1074
    %v1080 = vld [vmem:[%s6] sm:$0x1]
    %v1082 = vlaneseq
    %v1083 = vshrl.u32 %v1082, 7
    %v1084 = vsub.s32 0, %v1083
    %v1085 = vrot.slane %v1080, %v1084
    %v1087 = vadd.f32 %v1076, %v1085
    %v1088 = vadd.f32 %v1077, %v1085
    %v1089 = vadd.f32 %v1078, %v1085
    %v1090 = vadd.f32 %v1079, %v1085
    %v1091 = vld [vmem:[#allocation3] sm:$0xff]
    %v1092 = vld [vmem:[#allocation3 + $0x8] sm:$0xff]
    %v1093 = vld [vmem:[#allocation3 + $0x10] sm:$0xff]
    %v1094 = vld [vmem:[#allocation3 + $0x18] sm:$0xff]
    %v1095 = vadd.f32 %v1087, %v1091
    %v1096 = vadd.f32 %v1088, %v1092
    %v1097 = vadd.f32 %v1089, %v1093
    %v1098 = vadd.f32 %v1090, %v1094
    %v1099 = vmax.f32 %v1095, 0.0
    %v1100 = vmax.f32 %v1096, 0.0
    %v1101 = vmax.f32 %v1097, 0.0
    %v1102 = vmax.f32 %v1098, 0.0
    %1103 = vst [vmem:[#allocation9] sm:$0xff] %v1099
    %1104 = vst [vmem:[#allocation9 + $0x8] sm:$0xff] %v1100
    %1105 = vst [vmem:[#allocation9 + $0x10] sm:$0xff] %v1101
    %1106 = vst [vmem:[#allocation9 + $0x18] sm:$0xff] %v1102
    // Predicated region
    $region42: #{tpu_custom_call.1} parent=1 // pred_check
      _
    $region43: #{tpu_custom_call.1} parent=1 // pred_check_branch
      %1108 = sbr.rel (0) target = $region45
    $region44: #{tpu_custom_call.1} parent=1 // pred_region
      %s1110 = ssub.s32 512, 512
      %1111 = vsyncadd [#allocation5], %s1110
      %s1112 = sshll.u32 [#allocation9], 4
      %s1113 = int_to_ptr.vmem [resolvable:$true] %s1112
      %1118 = dma.vmem_to_hbm [thread:$0]  %s1113, 512, %s7, [#allocation5], 128, 128, 8
    $region45: #{tpu_custom_call.1} parent=1 // pred_fallthru
      _
    // Predicated region
    $region46: #{tpu_custom_call.1} parent=1 // pred_check
      _
    $region47: #{tpu_custom_call.1} parent=1 // pred_check_branch
      %1120 = sbr.rel (0) target = $region49
    $region48: #{tpu_custom_call.1} parent=1 // pred_region
      %1121 = dma.done [#allocation5], 512
    $region49: #{tpu_custom_call.1} parent=1 // pred_fallthru
      _
    %1122 = vsyncpa [#allocation4], 1
    %1123 = vsyncpa [#allocation7], 1
    %1124 = vsyncpa [#allocation5], 1

</llo_original>
